<compile_context>
chip_gen: v7x
topology: tpu7x:2x2x1
jax: 0.10.0
libtpu: 0.0.40
codegen_flags: <defaults>
</compile_context>

<pallas_src>
import math

import jax
import jax.numpy as jnp
from jax.experimental import pallas as pl
from jax.experimental.pallas import tpu as pltpu


def _round_up(x: int, m: int) -> int:
    return ((x + m - 1) // m) * m


# --------------------------------------------------------------------------- #
# Kernel
# --------------------------------------------------------------------------- #
def _mlp_kernel(x_ref, w1_ref, b1_ref, w2_ref, b2_ref, out_ref):
    # Cast activations to the compute dtype inside VMEM (no HBM pad/cast pass).
    x = x_ref[...].astype(w1_ref.dtype)
    # fc1 on the MXU, accumulate in f32.
    h = jnp.dot(x, w1_ref[...], preferred_element_type=jnp.float32)
    # bias + ReLU in f32 on the VPU (safe on v5e which has no bf16 VPU path).
    h = jnp.maximum(h + b1_ref[...], 0.0)
    # fc2: cast activations to the weight dtype for the second MXU pass.
    y = jnp.dot(h.astype(w2_ref.dtype), w2_ref[...],
                preferred_element_type=jnp.float32)
    out_ref[...] = (y + b2_ref[...]).astype(out_ref.dtype)


# --------------------------------------------------------------------------- #
# One-time parameter preparation (hoisted out of the per-call forward path)
# --------------------------------------------------------------------------- #
def prepare_params(w1, b1, w2, b2, *, compute_dtype=jnp.bfloat16,
                   lane_multiple=128):
    """Pad/cast the weights ONCE. Returns (w1_p, b1_p, w2_p, b2_p).

    Only the hidden dim is padded (and only when H > lane_multiple): padded
    w1 columns produce ReLU(0 + 0) = 0 activations which meet zero rows of
    w2, so the result is exact. D and C are never padded -- full-array-dim
    blocks are legal and the masked output store on small C is cheaper than
    a padded write + slice round trip.
    """
    D, H = w1.shape
    H2, C = w2.shape
    assert H2 == H and b1.shape == (H,) and b2.shape == (C,)

    H_pad = _round_up(H, lane_multiple) if H > lane_multiple else H

    w1_p = jnp.pad(w1, ((0, 0), (0, H_pad - H))).astype(compute_dtype)
    w2_p = jnp.pad(w2, ((0, H_pad - H), (0, 0))).astype(compute_dtype)
    # Biases stay f32 (the epilogue runs in f32).
    b1_p = jnp.pad(b1, (0, H_pad - H)).astype(jnp.float32).reshape(1, H_pad)
    b2_p = b2.astype(jnp.float32).reshape(1, C)
    return w1_p, b1_p, w2_p, b2_p


# --------------------------------------------------------------------------- #
# Forward
# --------------------------------------------------------------------------- #
def _choose_batch_tile(B, D, H_pad, C, x_bytes, w_bytes, out_bytes,
                       block_b, budget_bytes):
    """Largest batch tile (multiple of 8) whose VMEM footprint fits budget."""
    resident = (D * H_pad + H_pad * C) * w_bytes + (H_pad + C) * 4
    tb = max(8, min(_round_up(block_b, 8), _round_up(B, 8)))
    while True:
        per_step = (2 * tb * D * x_bytes        # double-buffered x tiles
                    + 2 * tb * C * out_bytes    # double-buffered out tiles
                    + tb * D * w_bytes          # in-kernel compute-dtype x copy
                    + tb * H_pad * (4 + w_bytes)  # f32 h + casted h
                    + tb * C * 4)               # f32 y before final cast
        if resident + per_step <= budget_bytes or tb <= 8:
            return tb, resident, per_step
        tb = max(8, _round_up(tb // 2, 8))


def _resident_spec(shape, single_buffer):
    """Constant-index (grid-invariant) BlockSpec for a VMEM-resident operand."""
    index_map = lambda i: (0,) * len(shape)
    if single_buffer:
        return pl.BlockSpec(shape, index_map, pipeline_mode=pl.Buffered(1))
    return pl.BlockSpec(shape, index_map)


def simple_nn_forward(x, w1_p, b1_p, w2_p, b2_p, *, block_b=512,
                      vmem_budget_bytes=48 << 20):
    """x: (B, D) in its native dtype; params from prepare_params().
    Returns (B, num_classes) in x.dtype."""
    B, D = x.shape
    D_w, H_pad = w1_p.shape
    assert D_w == D, f"input_size mismatch: x has {D}, w1 has {D_w}"
    C = w2_p.shape[1]
    out_dtype = x.dtype

    x_bytes = jnp.dtype(x.dtype).itemsize
    w_bytes = jnp.dtype(w1_p.dtype).itemsize
    out_bytes = jnp.dtype(out_dtype).itemsize

    # Batch tile sized against a VMEM budget (conservative for v7x: 64 MiB/TC).
    TB, resident_bytes, per_step_bytes = _choose_batch_tile(
        B, D, H_pad, C, x_bytes, w_bytes, out_bytes, block_b,
        vmem_budget_bytes)
    n_steps = pl.cdiv(B, TB)  # partial last block instead of padding B on HBM

    # Explicit scoped-VMEM limit (default is well below physical). Assume
    # double-buffered residents in the estimate so it also covers the
    # no-Buffered(1) fallback path; stay under v7x's 64 MiB/TC.
    vmem_need = 2 * resident_bytes + per_step_bytes + (2 << 20)
    vmem_limit = int(min(max(vmem_need, 8 << 20), 60 << 20))

    cost = pl.CostEstimate(
        flops=2 * B * (D * H_pad + H_pad * C),
        transcendentals=0,
        bytes_accessed=(x.size * x_bytes
                        + w1_p.size * w_bytes + w2_p.size * w_bytes
                        + b1_p.size * 4 + b2_p.size * 4
                        + B * C * out_bytes),
    )

    def _build_call(single_buffer_weights):
        return pl.pallas_call(
            _mlp_kernel,
            out_shape=jax.ShapeDtypeStruct((B, C), out_dtype),
            grid_spec=pl.GridSpec(
                grid=(n_steps,),
                in_specs=[
                    pl.BlockSpec((TB, D), lambda i: (i, 0)),          # x tile
                    _resident_spec((D, H_pad), single_buffer_weights),  # w1
                    _resident_spec((1, H_pad), single_buffer_weights),  # b1
                    _resident_spec((H_pad, C), single_buffer_weights),  # w2
                    _resident_spec((1, C), single_buffer_weights),      # b2
                ],
                out_specs=pl.BlockSpec((TB, C), lambda i: (i, 0)),
            ),
            compiler_params=pltpu.CompilerParams(
                dimension_semantics=("parallel",),   # megacore-friendly (v7x)
                vmem_limit_bytes=vmem_limit),
            cost_estimate=cost,
        )

    use_single_buffer = hasattr(pl, "Buffered")
    try:
        return _build_call(use_single_buffer)(x, w1_p, b1_p, w2_p, b2_p)
    except Exception:
        if not use_single_buffer:
            raise
        # Fallback for JAX builds where Buffered(1) does not lower cleanly.
        return _build_call(False)(x, w1_p, b1_p, w2_p, b2_p)


# --------------------------------------------------------------------------- #
# Init mimicking nn.Linear's default uniform(-1/sqrt(fan_in), 1/sqrt(fan_in))
# --------------------------------------------------------------------------- #
def init_params(key, input_size, hidden_size, num_classes, dtype=jnp.float32):
    k1, k2, k3, k4 = jax.random.split(key, 4)
    bound1 = 1.0 / math.sqrt(input_size)
    bound2 = 1.0 / math.sqrt(hidden_size)
    # Stored transposed relative to PyTorch: (in_features, out_features)
    w1 = jax.random.uniform(k1, (input_size, hidden_size), dtype, -bound1, bound1)
    b1 = jax.random.uniform(k2, (hidden_size,), dtype, -bound1, bound1)
    w2 = jax.random.uniform(k3, (hidden_size, num_classes), dtype, -bound2, bound2)
    b2 = jax.random.uniform(k4, (num_classes,), dtype, -bound2, bound2)
    return w1, b1, w2, b2


if __name__ == "__main__":
    input_size, hidden_size, num_classes = 32, 64, 16
    batch = 8

    key = jax.random.PRNGKey(0)
    kx, kp = jax.random.split(key)
    x = jax.random.normal(kx, (batch, input_size), jnp.float32)
    w1, b1, w2, b2 = init_params(kp, input_size, hidden_size, num_classes)

    # One-time param preparation (pad/cast hoisted out of the forward path).
    params = prepare_params(w1, b1, w2, b2)

    out = simple_nn_forward(x, *params)
    out = jax.block_until_ready(out)

    # pure-JAX f32 reference (kernel matmuls are bf16 -> loosened tolerance)
    ref = jnp.maximum(x @ w1 + b1, 0.0) @ w2 + b2
    assert out.shape == (batch, num_classes)
    assert jnp.allclose(out, ref, atol=2e-2, rtol=2e-2), (
        f"max abs err {jnp.max(jnp.abs(out - ref))}")

    print("KERNEL_OK")
</pallas_src>

<mosaic_0001>
module attributes {stable_mosaic.version = 11 : i64} {
  func.func @_mlp_kernel(%arg0: i32, %arg1: memref<8x32xf32, #tpu.memory_space<vmem>>, %arg2: memref<32x64xbf16, #tpu.memory_space<vmem>>, %arg3: memref<1x64xf32, #tpu.memory_space<vmem>>, %arg4: memref<64x16xbf16, #tpu.memory_space<vmem>>, %arg5: memref<1x16xf32, #tpu.memory_space<vmem>>, %arg6: memref<8x16xf32, #tpu.memory_space<vmem>>) attributes {dimension_semantics = [#tpu.dimension_semantics<parallel>], iteration_bounds = array<i64: 1>, scalar_prefetch = 0 : i64, scratch_operands = 0 : i64, tpu.core_type = #tpu.core_type<tc>, window_params = [{transform_indices = @transform_0, window_bounds = array<i64: 8, 32>}, {pipeline_mode = #tpu.pipeline_mode<synchronous>, transform_indices = @transform_1, window_bounds = array<i64: 32, 64>}, {pipeline_mode = #tpu.pipeline_mode<synchronous>, transform_indices = @transform_2, window_bounds = array<i64: 1, 64>}, {pipeline_mode = #tpu.pipeline_mode<synchronous>, transform_indices = @transform_3, window_bounds = array<i64: 64, 16>}, {pipeline_mode = #tpu.pipeline_mode<synchronous>, transform_indices = @transform_4, window_bounds = array<i64: 1, 16>}, {transform_indices = @transform_5, window_bounds = array<i64: 8, 16>}]} {
    %c0 = arith.constant 0 : index
    %c0_0 = arith.constant 0 : index
    %0 = vector.load %arg1[%c0, %c0_0] : memref<8x32xf32, #tpu.memory_space<vmem>>, vector<8x32xf32>
    %1 = arith.truncf %0 : vector<8x32xf32> to vector<8x32xbf16>
    %c0_1 = arith.constant 0 : index
    %c0_2 = arith.constant 0 : index
    %2 = vector.load %arg2[%c0_1, %c0_2] : memref<32x64xbf16, #tpu.memory_space<vmem>>, vector<32x64xbf16>
    %cst = arith.constant dense<0.000000e+00> : vector<8x64xf32>
    %3 = tpu.matmul %1, %2, %cst {dimension_numbers = #tpu.dot_dimension_numbers<[1], [0], [0], [1], [0, 0, 1, 1], [], []>} : vector<8x32xbf16>, vector<32x64xbf16>, vector<8x64xf32> -> vector<8x64xf32>
    %c0_3 = arith.constant 0 : index
    %c0_4 = arith.constant 0 : index
    %4 = vector.load %arg3[%c0_3, %c0_4] : memref<1x64xf32, #tpu.memory_space<vmem>>, vector<1x64xf32>
    %5 = vector.broadcast %4 : vector<1x64xf32> to vector<8x64xf32>
    %6 = arith.addf %3, %5 : vector<8x64xf32>
    %cst_5 = arith.constant 0.000000e+00 : f32
    %7 = vector.broadcast %cst_5 : f32 to vector<8x64xf32>
    %8 = arith.maximumf %6, %7 : vector<8x64xf32>
    %9 = arith.truncf %8 : vector<8x64xf32> to vector<8x64xbf16>
    %c0_6 = arith.constant 0 : index
    %c0_7 = arith.constant 0 : index
    %10 = vector.load %arg4[%c0_6, %c0_7] : memref<64x16xbf16, #tpu.memory_space<vmem>>, vector<64x16xbf16>
    %cst_8 = arith.constant dense<0.000000e+00> : vector<8x16xf32>
    %11 = tpu.matmul %9, %10, %cst_8 {dimension_numbers = #tpu.dot_dimension_numbers<[1], [0], [0], [1], [0, 0, 1, 1], [], []>} : vector<8x64xbf16>, vector<64x16xbf16>, vector<8x16xf32> -> vector<8x16xf32>
    %c0_9 = arith.constant 0 : index
    %c0_10 = arith.constant 0 : index
    %12 = vector.load %arg5[%c0_9, %c0_10] : memref<1x16xf32, #tpu.memory_space<vmem>>, vector<1x16xf32>
    %13 = vector.broadcast %12 : vector<1x16xf32> to vector<8x16xf32>
    %14 = arith.addf %11, %13 : vector<8x16xf32>
    %c0_11 = arith.constant 0 : index
    %c0_12 = arith.constant 0 : index
    %15 = vector.load %arg6[%c0_11, %c0_12] : memref<8x16xf32, #tpu.memory_space<vmem>>, vector<8x16xf32>
    tpu.vector_store %arg6[%c0_11, %c0_12], %14 {strides = array<i32>} : memref<8x16xf32, #tpu.memory_space<vmem>>, vector<8x16xf32>,
    return
  }
  func.func @transform_0(%arg0: i32) -> (i32, i32) {
    %c0_i32 = arith.constant 0 : i32
    %c0_i32_0 = arith.constant 0 : i32
    return %arg0, %c0_i32 : i32, i32
  }
  func.func @transform_1(%arg0: i32) -> (i32, i32) {
    %c0_i32 = arith.constant 0 : i32
    %c0_i32_0 = arith.constant 0 : i32
    %c0_i32_1 = arith.constant 0 : i32
    return %c0_i32, %c0_i32_0 : i32, i32
  }
  func.func @transform_2(%arg0: i32) -> (i32, i32) {
    %c0_i32 = arith.constant 0 : i32
    %c0_i32_0 = arith.constant 0 : i32
    %c0_i32_1 = arith.constant 0 : i32
    return %c0_i32, %c0_i32_0 : i32, i32
  }
  func.func @transform_3(%arg0: i32) -> (i32, i32) {
    %c0_i32 = arith.constant 0 : i32
    %c0_i32_0 = arith.constant 0 : i32
    %c0_i32_1 = arith.constant 0 : i32
    return %c0_i32, %c0_i32_0 : i32, i32
  }
  func.func @transform_4(%arg0: i32) -> (i32, i32) {
    %c0_i32 = arith.constant 0 : i32
    %c0_i32_0 = arith.constant 0 : i32
    %c0_i32_1 = arith.constant 0 : i32
    return %c0_i32, %c0_i32_0 : i32, i32
  }
  func.func @transform_5(%arg0: i32) -> (i32, i32) {
    %c0_i32 = arith.constant 0 : i32
    %c0_i32_0 = arith.constant 0 : i32
    return %arg0, %c0_i32 : i32, i32
  }
}

module attributes {stable_mosaic.version = 11 : i64} {
  func.func @_mlp_kernel(%arg0: i32, %arg1: memref<8x32xf32, #tpu.memory_space<vmem>>, %arg2: memref<32x64xbf16, #tpu.memory_space<vmem>>, %arg3: memref<1x64xf32, #tpu.memory_space<vmem>>, %arg4: memref<64x16xbf16, #tpu.memory_space<vmem>>, %arg5: memref<1x16xf32, #tpu.memory_space<vmem>>, %arg6: memref<8x16xf32, #tpu.memory_space<vmem>>) attributes {dimension_semantics = [#tpu.dimension_semantics<parallel>], iteration_bounds = array<i64: 1>, scalar_prefetch = 0 : i64, scratch_operands = 0 : i64, tpu.core_type = #tpu.core_type<tc>, window_params = [{transform_indices = @transform_0, window_bounds = array<i64: 8, 32>}, {pipeline_mode = #tpu.pipeline_mode<synchronous>, transform_indices = @transform_1, window_bounds = array<i64: 32, 64>}, {pipeline_mode = #tpu.pipeline_mode<synchronous>, transform_indices = @transform_2, window_bounds = array<i64: 1, 64>}, {pipeline_mode = #tpu.pipeline_mode<synchronous>, transform_indices = @transform_3, window_bounds = array<i64: 64, 16>}, {pipeline_mode = #tpu.pipeline_mode<synchronous>, transform_indices = @transform_4, window_bounds = array<i64: 1, 16>}, {transform_indices = @transform_5, window_bounds = array<i64: 8, 16>}]} {
    %c0 = arith.constant 0 : index
    %c0_0 = arith.constant 0 : index
    %0 = vector.load %arg1[%c0, %c0_0] : memref<8x32xf32, #tpu.memory_space<vmem>>, vector<8x32xf32>
    %1 = arith.truncf %0 : vector<8x32xf32> to vector<8x32xbf16>
    %c0_1 = arith.constant 0 : index
    %c0_2 = arith.constant 0 : index
    %2 = vector.load %arg2[%c0_1, %c0_2] : memref<32x64xbf16, #tpu.memory_space<vmem>>, vector<32x64xbf16>
    %cst = arith.constant dense<0.000000e+00> : vector<8x64xf32>
    %3 = tpu.matmul %1, %2, %cst {dimension_numbers = #tpu.dot_dimension_numbers<[1], [0], [0], [1], [0, 0, 1, 1], [], []>} : vector<8x32xbf16>, vector<32x64xbf16>, vector<8x64xf32> -> vector<8x64xf32>
    %c0_3 = arith.constant 0 : index
    %c0_4 = arith.constant 0 : index
    %4 = vector.load %arg3[%c0_3, %c0_4] : memref<1x64xf32, #tpu.memory_space<vmem>>, vector<1x64xf32>
    %5 = vector.broadcast %4 : vector<1x64xf32> to vector<8x64xf32>
    %6 = arith.addf %3, %5 : vector<8x64xf32>
    %cst_5 = arith.constant 0.000000e+00 : f32
    %7 = vector.broadcast %cst_5 : f32 to vector<8x64xf32>
    %8 = arith.maximumf %6, %7 : vector<8x64xf32>
    %9 = arith.truncf %8 : vector<8x64xf32> to vector<8x64xbf16>
    %c0_6 = arith.constant 0 : index
    %c0_7 = arith.constant 0 : index
    %10 = vector.load %arg4[%c0_6, %c0_7] : memref<64x16xbf16, #tpu.memory_space<vmem>>, vector<64x16xbf16>
    %cst_8 = arith.constant dense<0.000000e+00> : vector<8x16xf32>
    %11 = tpu.matmul %9, %10, %cst_8 {dimension_numbers = #tpu.dot_dimension_numbers<[1], [0], [0], [1], [0, 0, 1, 1], [], []>} : vector<8x64xbf16>, vector<64x16xbf16>, vector<8x16xf32> -> vector<8x16xf32>
    %c0_9 = arith.constant 0 : index
    %c0_10 = arith.constant 0 : index
    %12 = vector.load %arg5[%c0_9, %c0_10] : memref<1x16xf32, #tpu.memory_space<vmem>>, vector<1x16xf32>
    %13 = vector.broadcast %12 : vector<1x16xf32> to vector<8x16xf32>
    %14 = arith.addf %11, %13 : vector<8x16xf32>
    %c0_11 = arith.constant 0 : index
    %c0_12 = arith.constant 0 : index
    %15 = vector.load %arg6[%c0_11, %c0_12] : memref<8x16xf32, #tpu.memory_space<vmem>>, vector<8x16xf32>
    tpu.vector_store %arg6[%c0_11, %c0_12], %14 {strides = array<i32>} : memref<8x16xf32, #tpu.memory_space<vmem>>, vector<8x16xf32>,
    return
  }
  func.func @transform_0(%arg0: i32) -> (i32, i32) {
    %c0_i32 = arith.constant 0 : i32
    %c0_i32_0 = arith.constant 0 : i32
    return %arg0, %c0_i32 : i32, i32
  }
  func.func @transform_1(%arg0: i32) -> (i32, i32) {
    %c0_i32 = arith.constant 0 : i32
    %c0_i32_0 = arith.constant 0 : i32
    %c0_i32_1 = arith.constant 0 : i32
    return %c0_i32, %c0_i32_0 : i32, i32
  }
  func.func @transform_2(%arg0: i32) -> (i32, i32) {
    %c0_i32 = arith.constant 0 : i32
    %c0_i32_0 = arith.constant 0 : i32
    %c0_i32_1 = arith.constant 0 : i32
    return %c0_i32, %c0_i32_0 : i32, i32
  }
  func.func @transform_3(%arg0: i32) -> (i32, i32) {
    %c0_i32 = arith.constant 0 : i32
    %c0_i32_0 = arith.constant 0 : i32
    %c0_i32_1 = arith.constant 0 : i32
    return %c0_i32, %c0_i32_0 : i32, i32
  }
  func.func @transform_4(%arg0: i32) -> (i32, i32) {
    %c0_i32 = arith.constant 0 : i32
    %c0_i32_0 = arith.constant 0 : i32
    %c0_i32_1 = arith.constant 0 : i32
    return %c0_i32, %c0_i32_0 : i32, i32
  }
  func.func @transform_5(%arg0: i32) -> (i32, i32) {
    %c0_i32 = arith.constant 0 : i32
    %c0_i32_0 = arith.constant 0 : i32
    return %arg0, %c0_i32 : i32, i32
  }
}

</mosaic_0001>

<llo_original>
// kernel: tpu_custom_call.1
$region0: #{tpu_custom_call.1}
  #allocation0 [shape = 'u32[]', space=smem, size = 0x4, offset = 0x4, fixed_abs, tag = 'smem constant byte address 0x4 - core index']
  #allocation1 [shape = 'u32[144,128]{1,0:T(1,128)}', space=vmem, size = 0x12000, scoped, tag = 'internal scratch']
  %s0 = inlined_call_operand.vmem [shape: f32[8,32], index: 0, kind: input, shape index: {}]
  %s1 = inlined_call_operand.vmem [shape: bf16[32,64], index: 1, kind: input, shape index: {}]
  %s2 = inlined_call_operand.vmem [shape: f32[1,64], index: 2, kind: input, shape index: {}]
  %s3 = inlined_call_operand.vmem [shape: bf16[64,16], index: 3, kind: input, shape index: {}]
  %s4 = inlined_call_operand.vmem [shape: f32[1,16], index: 4, kind: input, shape index: {}]
  %s5 = inlined_call_operand.hbm [shape: f32[8,16], index: 5, kind: output, shape index: {}]
  %s6 = sld [smem:[#allocation0]]
  $region30: #{tpu_custom_call.1} parent=0
    _
  %s8 = ssub.s32 1, %s6
  %s9 = scalar_select 0, %s8, %s6
  $region1: #{tpu_custom_call.1} parent=0
    #allocation2 [shape = 'u8[4096]{0}', space=vmem, size = 0x1000, scoped, tag = 'output window, operand 0, single buffered']
    #allocation3 [shape = 's32[1]{0}', space=sflag, size = 0x4, scoped, tag = 'scoped memory for tpu_custom_call.1']
    %10 = vsyncpa [#allocation3], 0
    // Predicated region
    $region2: #{tpu_custom_call.1} parent=1 // pred_check
      _
    $region3: #{tpu_custom_call.1} parent=1 // pred_check_branch
      %12 = sbr.rel (0) target = $region5
    $region4: #{tpu_custom_call.1} parent=1 // pred_region
      _
    $region5: #{tpu_custom_call.1} parent=1 // pred_fallthru
      _
    // Predicated region
    $region6: #{tpu_custom_call.1} parent=1 // pred_check
      _
    $region7: #{tpu_custom_call.1} parent=1 // pred_check_branch
      %14 = sbr.rel (0) target = $region9
    $region8: #{tpu_custom_call.1} parent=1 // pred_region
      _
    $region9: #{tpu_custom_call.1} parent=1 // pred_fallthru
      _
    // Predicated region
    $region10: #{tpu_custom_call.1} parent=1 // pred_check
      _
    $region11: #{tpu_custom_call.1} parent=1 // pred_check_branch
      %16 = sbr.rel (0) target = $region13
    $region12: #{tpu_custom_call.1} parent=1 // pred_region
      _
    $region13: #{tpu_custom_call.1} parent=1 // pred_fallthru
      _
    // Predicated region
    $region14: #{tpu_custom_call.1} parent=1 // pred_check
      _
    $region15: #{tpu_custom_call.1} parent=1 // pred_check_branch
      %18 = sbr.rel (0) target = $region17
    $region16: #{tpu_custom_call.1} parent=1 // pred_region
      _
    $region17: #{tpu_custom_call.1} parent=1 // pred_fallthru
      _
    // Predicated region
    $region18: #{tpu_custom_call.1} parent=1 // pred_check
      _
    $region19: #{tpu_custom_call.1} parent=1 // pred_check_branch
      %20 = sbr.rel (0) target = $region21
    $region20: #{tpu_custom_call.1} parent=1 // pred_region
      _
    $region21: #{tpu_custom_call.1} parent=1 // pred_fallthru
      _
    %v22 = vld [vmem:[%s0] sm:$0xff]
    %v23 = vpack.c.bf16 %v22, %v22
    %v24 = vld [vmem:[%s1] sm:$0xf]
    %v25 = vld [vmem:[%s1 + $0x4] sm:$0xf]
    %v26 = vld [vmem:[%s1 + $0x8] sm:$0xf]
    %v27 = vld [vmem:[%s1 + $0xc] sm:$0xf]
    %v28 = vld [vmem:[%s2] sm:$0x1]
    %v30 = vlaneseq
    %v31 = vshrl.u32 %v30, 7
    %v32 = vsub.s32 0, %v31
    %v33 = vrot.slane %v28, %v32
    %v39 = vunpack.c.l.b16 %v24
    %v40 = vunpack.c.l.b16 %v25
    %v41 = vunpack.c.l.b16 %v26
    %v42 = vunpack.c.l.b16 %v27
    %v43 = vpack.c.b16 %v40, %v39
    %v44 = vpack.c.b16 %v42, %v41
    %vm47 = vcmask 261120
    %v49 = vsel %vm47, %v23, 0
    %51 = vmatprep.subr.bf16.mxu0 0
    %52 = vmatpush1.bf16.msra.mxu0 %v43
    %53 = vmatprep.subr.bf16.mxu0 0
    %54 = vmatpush1.bf16.msra.mxu0 %v44
    %55 = vmatprep.subr.bf16.mxu0 0
    %56 = vmatpush1.bf16.msra.mxu0 0
    %57 = vmatprep.subr.bf16.mxu0 0
    %58 = vmatpush1.bf16.msra.mxu0 0
    %59 = vmatprep.subr.bf16.mxu0 0
    %60 = vmatpush1.bf16.msra.mxu0 0
    %61 = vmatprep.subr.bf16.mxu0 0
    %62 = vmatpush1.bf16.msra.mxu0 0
    %63 = vmatprep.subr.bf16.mxu0 0
    %64 = vmatpush1.bf16.msra.mxu0 0
    %65 = vmatprep.subr.bf16.mxu0 0
    %66 = vmatpush1.bf16.msra.mxu0 0
    %67 = vmatprep.subr.bf16.mxu0 0
    %68 = vmatpush1.bf16.msra.mxu0 0
    %69 = vmatprep.subr.bf16.mxu0 0
    %70 = vmatpush1.bf16.msra.mxu0 0
    %71 = vmatprep.subr.bf16.mxu0 0
    %72 = vmatpush1.bf16.msra.mxu0 0
    %73 = vmatprep.subr.bf16.mxu0 0
    %74 = vmatpush1.bf16.msra.mxu0 0
    %75 = vmatprep.subr.bf16.mxu0 0
    %76 = vmatpush1.bf16.msra.mxu0 0
    %77 = vmatprep.subr.bf16.mxu0 0
    %78 = vmatpush1.bf16.msra.mxu0 0
    %79 = vmatprep.subr.bf16.mxu0 0
    %80 = vmatpush1.bf16.msra.mxu0 0
    %81 = vmatprep.subr.bf16.mxu0 0
    %82 = vmatpush1.bf16.msra.mxu0 0
    %83 = vmatprep.mubr.bf16.mxu0 0
    %84 = vmatmul.mubr.bf16.gmra.mrb[0].mxu0 %v49
    %v85 = vpop.f32.mrb[0].mxu0
    %v86 = vadd.f32 %v33, %v85
    %v87 = vpop.f32.mrb[0].mxu0
    %v88 = vpop.f32.mrb[0].mxu0
    %v89 = vpop.f32.mrb[0].mxu0
    %90 = vdwg.mxu0
    %v91 = vmax.f32 %v86, 0.0
    %v92 = vpack.c.bf16 %v91, %v91
    %v93 = vld [vmem:[%s3] sm:$0xf]
    %v94 = vld [vmem:[%s3 + $0x4] sm:$0xf]
    %v95 = vld [vmem:[%s3 + $0x8] sm:$0xf]
    %v96 = vld [vmem:[%s3 + $0xc] sm:$0xf]
    %v97 = vld [vmem:[%s3 + $0x10] sm:$0xf]
    %v98 = vld [vmem:[%s3 + $0x14] sm:$0xf]
    %v99 = vld [vmem:[%s3 + $0x18] sm:$0xf]
    %v100 = vld [vmem:[%s3 + $0x1c] sm:$0xf]
    %v101 = vld [vmem:[%s4] sm:$0x1]
    %v103 = vlaneseq
    %v104 = vshrl.u32 %v103, 7
    %v105 = vsub.s32 0, %v104
    %v106 = vrot.slane %v101, %v105
    %v116 = vunpack.c.l.b16 %v93
    %v117 = vunpack.c.l.b16 %v94
    %v118 = vunpack.c.l.b16 %v95
    %v119 = vunpack.c.l.b16 %v96
    %v120 = vunpack.c.l.b16 %v97
    %v121 = vunpack.c.l.b16 %v98
    %v122 = vunpack.c.l.b16 %v99
    %v123 = vunpack.c.l.b16 %v100
    %v124 = vpack.c.b16 %v117, %v116
    %v125 = vpack.c.b16 %v119, %v118
    %v126 = vpack.c.b16 %v121, %v120
    %v127 = vpack.c.b16 %v123, %v122
    %vm132 = vcmask 523264
    %v134 = vsel %vm132, %v92, 0
    %136 = vmatprep.subr.bf16.mxu0 0
    %137 = vmatpush1.bf16.msra.mxu0 %v124
    %138 = vmatprep.subr.bf16.mxu0 0
    %139 = vmatpush1.bf16.msra.mxu0 %v125
    %140 = vmatprep.subr.bf16.mxu0 0
    %141 = vmatpush1.bf16.msra.mxu0 %v126
    %142 = vmatprep.subr.bf16.mxu0 0
    %143 = vmatpush1.bf16.msra.mxu0 %v127
    %144 = vmatprep.subr.bf16.mxu0 0
    %145 = vmatpush1.bf16.msra.mxu0 0
    %146 = vmatprep.subr.bf16.mxu0 0
    %147 = vmatpush1.bf16.msra.mxu0 0
    %148 = vmatprep.subr.bf16.mxu0 0
    %149 = vmatpush1.bf16.msra.mxu0 0
    %150 = vmatprep.subr.bf16.mxu0 0
    %151 = vmatpush1.bf16.msra.mxu0 0
    %152 = vmatprep.subr.bf16.mxu0 0
    %153 = vmatpush1.bf16.msra.mxu0 0
    %154 = vmatprep.subr.bf16.mxu0 0
    %155 = vmatpush1.bf16.msra.mxu0 0
    %156 = vmatprep.subr.bf16.mxu0 0
    %157 = vmatpush1.bf16.msra.mxu0 0
    %158 = vmatprep.subr.bf16.mxu0 0
    %159 = vmatpush1.bf16.msra.mxu0 0
    %160 = vmatprep.subr.bf16.mxu0 0
    %161 = vmatpush1.bf16.msra.mxu0 0
    %162 = vmatprep.subr.bf16.mxu0 0
    %163 = vmatpush1.bf16.msra.mxu0 0
    %164 = vmatprep.subr.bf16.mxu0 0
    %165 = vmatpush1.bf16.msra.mxu0 0
    %166 = vmatprep.subr.bf16.mxu0 0
    %167 = vmatpush1.bf16.msra.mxu0 0
    %168 = vmatprep.mubr.bf16.mxu0 0
    %169 = vmatmul.mubr.bf16.gmra.mrb[0].mxu0 %v134
    %v170 = vpop.f32.mrb[0].mxu0
    %v171 = vadd.f32 %v106, %v170
    %v172 = vpop.f32.mrb[0].mxu0
    %v173 = vpop.f32.mrb[0].mxu0
    %v174 = vpop.f32.mrb[0].mxu0
    %175 = vdwg.mxu0
    %vm176 = vcmask 130048
    %177 = vst.msk [vmem:[#allocation2] sm:$0xff] %vm176, %v171
    // Predicated region
    $region22: #{tpu_custom_call.1} parent=1 // pred_check
      _
    $region23: #{tpu_custom_call.1} parent=1 // pred_check_branch
      %179 = sbr.rel (0) target = $region25
    $region24: #{tpu_custom_call.1} parent=1 // pred_region
      %s181 = ssub.s32 128, 128
      %182 = vsyncadd [#allocation3], %s181
      %s184 = sshll.u32 [#allocation2], 4
      %s185 = int_to_ptr.vmem [resolvable:$true] %s184
      %187 = dma.vmem_to_hbm [thread:$0]  %s185, 128, %s5, [#allocation3]
    $region25: #{tpu_custom_call.1} parent=1 // pred_fallthru
      _
    // Predicated region
    $region26: #{tpu_custom_call.1} parent=1 // pred_check
      _
    $region27: #{tpu_custom_call.1} parent=1 // pred_check_branch
      %189 = sbr.rel (0) target = $region29
    $region28: #{tpu_custom_call.1} parent=1 // pred_region
      %190 = dma.done [#allocation3], 128
    $region29: #{tpu_custom_call.1} parent=1 // pred_fallthru
      _
    %191 = vsyncpa [#allocation3], 1

// kernel: tpu_custom_call.1
$region0: #{tpu_custom_call.1}
  #allocation0 [shape = 'u32[]', space=smem, size = 0x4, offset = 0x4, fixed_abs, tag = 'smem constant byte address 0x4 - core index']
  #allocation1 [shape = 'u32[144,128]{1,0:T(1,128)}', space=vmem, size = 0x12000, scoped, tag = 'internal scratch']
  %s0 = inlined_call_operand.vmem [shape: f32[8,32], index: 0, kind: input, shape index: {}]
  %s1 = inlined_call_operand.vmem [shape: bf16[32,64], index: 1, kind: input, shape index: {}]
  %s2 = inlined_call_operand.vmem [shape: f32[1,64], index: 2, kind: input, shape index: {}]
  %s3 = inlined_call_operand.vmem [shape: bf16[64,16], index: 3, kind: input, shape index: {}]
  %s4 = inlined_call_operand.vmem [shape: f32[1,16], index: 4, kind: input, shape index: {}]
  %s5 = inlined_call_operand.hbm [shape: f32[8,16], index: 5, kind: output, shape index: {}]
  %s6 = sld [smem:[#allocation0]]
  $region30: #{tpu_custom_call.1} parent=0
    _
  %s8 = ssub.s32 1, %s6
  %s9 = scalar_select 0, %s8, %s6
  $region1: #{tpu_custom_call.1} parent=0
    #allocation2 [shape = 'u8[4096]{0}', space=vmem, size = 0x1000, scoped, tag = 'output window, operand 0, single buffered']
    #allocation3 [shape = 's32[1]{0}', space=sflag, size = 0x4, scoped, tag = 'scoped memory for tpu_custom_call.1']
    %10 = vsyncpa [#allocation3], 0
    // Predicated region
    $region2: #{tpu_custom_call.1} parent=1 // pred_check
      _
    $region3: #{tpu_custom_call.1} parent=1 // pred_check_branch
      %12 = sbr.rel (0) target = $region5
    $region4: #{tpu_custom_call.1} parent=1 // pred_region
      _
    $region5: #{tpu_custom_call.1} parent=1 // pred_fallthru
      _
    // Predicated region
    $region6: #{tpu_custom_call.1} parent=1 // pred_check
      _
    $region7: #{tpu_custom_call.1} parent=1 // pred_check_branch
      %14 = sbr.rel (0) target = $region9
    $region8: #{tpu_custom_call.1} parent=1 // pred_region
      _
    $region9: #{tpu_custom_call.1} parent=1 // pred_fallthru
      _
    // Predicated region
    $region10: #{tpu_custom_call.1} parent=1 // pred_check
      _
    $region11: #{tpu_custom_call.1} parent=1 // pred_check_branch
      %16 = sbr.rel (0) target = $region13
    $region12: #{tpu_custom_call.1} parent=1 // pred_region
      _
    $region13: #{tpu_custom_call.1} parent=1 // pred_fallthru
      _
    // Predicated region
    $region14: #{tpu_custom_call.1} parent=1 // pred_check
      _
    $region15: #{tpu_custom_call.1} parent=1 // pred_check_branch
      %18 = sbr.rel (0) target = $region17
    $region16: #{tpu_custom_call.1} parent=1 // pred_region
      _
    $region17: #{tpu_custom_call.1} parent=1 // pred_fallthru
      _
    // Predicated region
    $region18: #{tpu_custom_call.1} parent=1 // pred_check
      _
    $region19: #{tpu_custom_call.1} parent=1 // pred_check_branch
      %20 = sbr.rel (0) target = $region21
    $region20: #{tpu_custom_call.1} parent=1 // pred_region
      _
    $region21: #{tpu_custom_call.1} parent=1 // pred_fallthru
      _
    %v22 = vld [vmem:[%s0] sm:$0xff]
    %v23 = vpack.c.bf16 %v22, %v22
    %v24 = vld [vmem:[%s1] sm:$0xf]
    %v25 = vld [vmem:[%s1 + $0x4] sm:$0xf]
    %v26 = vld [vmem:[%s1 + $0x8] sm:$0xf]
    %v27 = vld [vmem:[%s1 + $0xc] sm:$0xf]
    %v28 = vld [vmem:[%s2] sm:$0x1]
    %v30 = vlaneseq
    %v31 = vshrl.u32 %v30, 7
    %v32 = vsub.s32 0, %v31
    %v33 = vrot.slane %v28, %v32
    %v39 = vunpack.c.l.b16 %v24
    %v40 = vunpack.c.l.b16 %v25
    %v41 = vunpack.c.l.b16 %v26
    %v42 = vunpack.c.l.b16 %v27
    %v43 = vpack.c.b16 %v40, %v39
    %v44 = vpack.c.b16 %v42, %v41
    %vm47 = vcmask 261120
    %v49 = vsel %vm47, %v23, 0
    %51 = vmatprep.subr.bf16.mxu0 0
    %52 = vmatpush1.bf16.msra.mxu0 %v43
    %53 = vmatprep.subr.bf16.mxu0 0
    %54 = vmatpush1.bf16.msra.mxu0 %v44
    %55 = vmatprep.subr.bf16.mxu0 0
    %56 = vmatpush1.bf16.msra.mxu0 0
    %57 = vmatprep.subr.bf16.mxu0 0
    %58 = vmatpush1.bf16.msra.mxu0 0
    %59 = vmatprep.subr.bf16.mxu0 0
    %60 = vmatpush1.bf16.msra.mxu0 0
    %61 = vmatprep.subr.bf16.mxu0 0
    %62 = vmatpush1.bf16.msra.mxu0 0
    %63 = vmatprep.subr.bf16.mxu0 0
    %64 = vmatpush1.bf16.msra.mxu0 0
    %65 = vmatprep.subr.bf16.mxu0 0
    %66 = vmatpush1.bf16.msra.mxu0 0
    %67 = vmatprep.subr.bf16.mxu0 0
    %68 = vmatpush1.bf16.msra.mxu0 0
    %69 = vmatprep.subr.bf16.mxu0 0
    %70 = vmatpush1.bf16.msra.mxu0 0
    %71 = vmatprep.subr.bf16.mxu0 0
    %72 = vmatpush1.bf16.msra.mxu0 0
    %73 = vmatprep.subr.bf16.mxu0 0
    %74 = vmatpush1.bf16.msra.mxu0 0
    %75 = vmatprep.subr.bf16.mxu0 0
    %76 = vmatpush1.bf16.msra.mxu0 0
    %77 = vmatprep.subr.bf16.mxu0 0
    %78 = vmatpush1.bf16.msra.mxu0 0
    %79 = vmatprep.subr.bf16.mxu0 0
    %80 = vmatpush1.bf16.msra.mxu0 0
    %81 = vmatprep.subr.bf16.mxu0 0
    %82 = vmatpush1.bf16.msra.mxu0 0
    %83 = vmatprep.mubr.bf16.mxu0 0
    %84 = vmatmul.mubr.bf16.gmra.mrb[0].mxu0 %v49
    %v85 = vpop.f32.mrb[0].mxu0
    %v86 = vadd.f32 %v33, %v85
    %v87 = vpop.f32.mrb[0].mxu0
    %v88 = vpop.f32.mrb[0].mxu0
    %v89 = vpop.f32.mrb[0].mxu0
    %90 = vdwg.mxu0
    %v91 = vmax.f32 %v86, 0.0
    %v92 = vpack.c.bf16 %v91, %v91
    %v93 = vld [vmem:[%s3] sm:$0xf]
    %v94 = vld [vmem:[%s3 + $0x4] sm:$0xf]
    %v95 = vld [vmem:[%s3 + $0x8] sm:$0xf]
    %v96 = vld [vmem:[%s3 + $0xc] sm:$0xf]
    %v97 = vld [vmem:[%s3 + $0x10] sm:$0xf]
    %v98 = vld [vmem:[%s3 + $0x14] sm:$0xf]
    %v99 = vld [vmem:[%s3 + $0x18] sm:$0xf]
    %v100 = vld [vmem:[%s3 + $0x1c] sm:$0xf]
    %v101 = vld [vmem:[%s4] sm:$0x1]
    %v103 = vlaneseq
    %v104 = vshrl.u32 %v103, 7
    %v105 = vsub.s32 0, %v104
    %v106 = vrot.slane %v101, %v105
    %v116 = vunpack.c.l.b16 %v93
    %v117 = vunpack.c.l.b16 %v94
    %v118 = vunpack.c.l.b16 %v95
    %v119 = vunpack.c.l.b16 %v96
    %v120 = vunpack.c.l.b16 %v97
    %v121 = vunpack.c.l.b16 %v98
    %v122 = vunpack.c.l.b16 %v99
    %v123 = vunpack.c.l.b16 %v100
    %v124 = vpack.c.b16 %v117, %v116
    %v125 = vpack.c.b16 %v119, %v118
    %v126 = vpack.c.b16 %v121, %v120
    %v127 = vpack.c.b16 %v123, %v122
    %vm132 = vcmask 523264
    %v134 = vsel %vm132, %v92, 0
    %136 = vmatprep.subr.bf16.mxu0 0
    %137 = vmatpush1.bf16.msra.mxu0 %v124
    %138 = vmatprep.subr.bf16.mxu0 0
    %139 = vmatpush1.bf16.msra.mxu0 %v125
    %140 = vmatprep.subr.bf16.mxu0 0
    %141 = vmatpush1.bf16.msra.mxu0 %v126
    %142 = vmatprep.subr.bf16.mxu0 0
    %143 = vmatpush1.bf16.msra.mxu0 %v127
    %144 = vmatprep.subr.bf16.mxu0 0
    %145 = vmatpush1.bf16.msra.mxu0 0
    %146 = vmatprep.subr.bf16.mxu0 0
    %147 = vmatpush1.bf16.msra.mxu0 0
    %148 = vmatprep.subr.bf16.mxu0 0
    %149 = vmatpush1.bf16.msra.mxu0 0
    %150 = vmatprep.subr.bf16.mxu0 0
    %151 = vmatpush1.bf16.msra.mxu0 0
    %152 = vmatprep.subr.bf16.mxu0 0
    %153 = vmatpush1.bf16.msra.mxu0 0
    %154 = vmatprep.subr.bf16.mxu0 0
    %155 = vmatpush1.bf16.msra.mxu0 0
    %156 = vmatprep.subr.bf16.mxu0 0
    %157 = vmatpush1.bf16.msra.mxu0 0
    %158 = vmatprep.subr.bf16.mxu0 0
    %159 = vmatpush1.bf16.msra.mxu0 0
    %160 = vmatprep.subr.bf16.mxu0 0
    %161 = vmatpush1.bf16.msra.mxu0 0
    %162 = vmatprep.subr.bf16.mxu0 0
    %163 = vmatpush1.bf16.msra.mxu0 0
    %164 = vmatprep.subr.bf16.mxu0 0
    %165 = vmatpush1.bf16.msra.mxu0 0
    %166 = vmatprep.subr.bf16.mxu0 0
    %167 = vmatpush1.bf16.msra.mxu0 0
    %168 = vmatprep.mubr.bf16.mxu0 0
    %169 = vmatmul.mubr.bf16.gmra.mrb[0].mxu0 %v134
    %v170 = vpop.f32.mrb[0].mxu0
    %v171 = vadd.f32 %v106, %v170
    %v172 = vpop.f32.mrb[0].mxu0
    %v173 = vpop.f32.mrb[0].mxu0
    %v174 = vpop.f32.mrb[0].mxu0
    %175 = vdwg.mxu0
    %vm176 = vcmask 130048
    %177 = vst.msk [vmem:[#allocation2] sm:$0xff] %vm176, %v171
    // Predicated region
    $region22: #{tpu_custom_call.1} parent=1 // pred_check
      _
    $region23: #{tpu_custom_call.1} parent=1 // pred_check_branch
      %179 = sbr.rel (0) target = $region25
    $region24: #{tpu_custom_call.1} parent=1 // pred_region
      %s181 = ssub.s32 128, 128
      %182 = vsyncadd [#allocation3], %s181
      %s184 = sshll.u32 [#allocation2], 4
      %s185 = int_to_ptr.vmem [resolvable:$true] %s184
      %187 = dma.vmem_to_hbm [thread:$0]  %s185, 128, %s5, [#allocation3]
    $region25: #{tpu_custom_call.1} parent=1 // pred_fallthru
      _
    // Predicated region
    $region26: #{tpu_custom_call.1} parent=1 // pred_check
      _
    $region27: #{tpu_custom_call.1} parent=1 // pred_check_branch
      %189 = sbr.rel (0) target = $region29
    $region28: #{tpu_custom_call.1} parent=1 // pred_region
      %190 = dma.done [#allocation3], 128
    $region29: #{tpu_custom_call.1} parent=1 // pred_fallthru
      _
    %191 = vsyncpa [#allocation3], 1

</llo_original>
